<compile_context>
chip_gen: v5e
topology: v5e:2x2
jax: 0.10.0
libtpu: 0.0.40
codegen_flags: <defaults>
</compile_context>

<pallas_src>
import jax
import jax.numpy as jnp
from jax.experimental import pallas as pl
from jax.experimental.pallas import tpu as pltpu


def _vmem_budget():
    """Returns (target input-block bytes, scoped VMEM limit) for the current TPU generation."""
    try:
        cap = pltpu.get_tpu_info().vmem_capacity_bytes
    except Exception:
        cap = 64 << 20              # conservative (v7x-sized) fallback if the query fails
    if cap >= (128 << 20):          # v5e / v6e: 128 MiB physical VMEM
        return 8 << 20, 96 << 20
    return 4 << 20, 48 << 20        # v7x: 64 MiB physical VMEM -> leave headroom


def _choose_tile_rows(R, C, lane_w, itemsize, target_block_bytes):
    """Largest multiple-of-8 row count whose [C, rows, lane_w] block fits the byte target."""
    max_rows = target_block_bytes // max(1, C * lane_w * itemsize)
    max_rows = max(8, (max_rows // 8) * 8)
    if R <= max_rows:
        return R                    # single full-extent block (full array dim is always legal)
    return max_rows                 # multiple of 8, masking handles the ragged tail


def _make_kernel(C, tile_rows, lane_w, nb_per_split, r_total, need_mask):
    def kernel(pred_ref, gt_ref, out_ref, ce_acc, inter_acc, total_acc):
        p = pl.program_id(1)
        r = pl.program_id(2)

        @pl.when(r == 0)
        def _init():
            ce_acc[...] = jnp.zeros_like(ce_acc)
            inter_acc[...] = jnp.zeros_like(inter_acc)
            total_acc[...] = jnp.zeros_like(total_acc)

        # Pass 1: channel max (C-1 elementwise maxes over lane-dense [tile_rows, lane_w] tiles).
        m = pred_ref[0].astype(jnp.float32)
        for c in range(1, C):
            m = jnp.maximum(m, pred_ref[c].astype(jnp.float32))

        # Pass 2 (fused): per channel, accumulate the softmax denominator, CE partials and IoU
        # partials without materializing any [C, tile_rows, lane_w] f32 temporaries.
        sum_e = sum_t = sum_tx = inter = total = None
        for c in range(C):
            xc = pred_ref[c].astype(jnp.float32)
            tc = gt_ref[c].astype(jnp.float32)
            ec = jnp.exp(xc - m)
            sc = jax.nn.sigmoid(xc)             # single EUP logistic, no explicit divide
            if c == 0:
                sum_e, sum_t, sum_tx = ec, tc, tc * xc
                inter, total = sc * tc, sc + tc
            else:
                sum_e = sum_e + ec
                sum_t = sum_t + tc
                sum_tx = sum_tx + tc * xc
                inter = inter + sc * tc
                total = total + sc + tc

        lse = m + jnp.log(sum_e)
        ce = sum_t * lse - sum_tx               # = -sum_c t * log_softmax(x), per position

        if need_mask:
            # Ragged tail / imbalanced split: zero out contributions from invalid rows.
            g = p * nb_per_split + r            # global row-block index
            rem = r_total - g * tile_rows       # valid rows remaining for this block
            row_ids = jax.lax.broadcasted_iota(jnp.int32, (tile_rows, lane_w), 0)
            valid = row_ids < rem
            ce = jnp.where(valid, ce, 0.0)
            inter = jnp.where(valid, inter, 0.0)
            total = jnp.where(valid, total, 0.0)

        ce_acc[...] += ce
        inter_acc[...] += inter
        total_acc[...] += total

        @pl.when(r == pl.num_programs(2) - 1)
        def _finalize():
            # One cross-lane reduce per quantity per (n, split); lane-dense 128-wide stores.
            out_ref[0:1, :] = jnp.full((1, 128), jnp.sum(ce_acc[...]), dtype=jnp.float32)
            out_ref[1:2, :] = jnp.full((1, 128), jnp.sum(inter_acc[...]), dtype=jnp.float32)
            out_ref[2:3, :] = jnp.full((1, 128), jnp.sum(total_acc[...]), dtype=jnp.float32)

    return kernel


def segmentation_loss(pred, ground_truth, smooth=1.0):
    """pred, ground_truth: [N, C, H, W] float arrays (NCHW, matching PyTorch)."""
    N, C, H, W = pred.shape
    num_positions = N * H * W                   # CE 'mean' divisor
    itemsize = jnp.dtype(pred.dtype).itemsize
    S = H * W

    # Lane-dense view: fold the flattened spatial axis into 128-wide lanes when possible
    # (a free reshape of contiguous NCHW); otherwise keep (H, W) and tile H.
    if S % 128 == 0:
        lane_w, R = 128, S // 128
        pred_v = pred.reshape(N, C, R, lane_w)
        gt_v = ground_truth.reshape(N, C, R, lane_w)
    else:
        lane_w, R = W, H
        pred_v, gt_v = pred, ground_truth

    target_block_bytes, vmem_limit = _vmem_budget()
    tile_rows = _choose_tile_rows(R, C, lane_w, itemsize, target_block_bytes)
    nb = pl.cdiv(R, tile_rows)                  # total row blocks

    # Explicit 2-way split of the row-block range so both v7x TensorCores get work at N == 1.
    num_splits = 2 if nb >= 2 else 1
    nb_per_split = pl.cdiv(nb, num_splits)
    need_mask = (R % tile_rows != 0) or (num_splits * nb_per_split != nb)
    clamp = num_splits * nb_per_split != nb     # imbalanced split -> last block repeats, masked

    def in_index_map(n, p, r):
        g = p * nb_per_split + r
        if clamp:
            g = jnp.minimum(g, nb - 1)
        return (n, 0, g, 0)

    grid = (N, num_splits, nb_per_split)

    cost = pl.CostEstimate(
        flops=14 * N * C * R * lane_w,
        transcendentals=(2 * C + 1) * N * R * lane_w,
        bytes_accessed=2 * N * C * R * lane_w * itemsize + N * num_splits * 3 * 128 * 4,
    )

    kernel = _make_kernel(C, tile_rows, lane_w, nb_per_split, R, need_mask)

    partials = pl.pallas_call(
        kernel,
        out_shape=jax.ShapeDtypeStruct((N, num_splits, 3, 128), jnp.float32),
        grid_spec=pltpu.PrefetchScalarGridSpec(
            num_scalar_prefetch=0,
            grid=grid,
            in_specs=[
                pl.BlockSpec((None, C, tile_rows, lane_w), in_index_map),
                pl.BlockSpec((None, C, tile_rows, lane_w), in_index_map),
            ],
            out_specs=pl.BlockSpec((None, None, 3, 128), lambda n, p, r: (n, p, 0, 0)),
            scratch_shapes=[pltpu.VMEM((tile_rows, lane_w), jnp.float32)] * 3,
        ),
        compiler_params=pltpu.CompilerParams(
            dimension_semantics=("parallel", "parallel", "arbitrary"),
            vmem_limit_bytes=vmem_limit,
        ),
        cost_estimate=cost,
    )(pred_v, gt_v)

    # Finalize: tiny scalar math once, outside the streaming kernel.
    ce_sum = jnp.sum(partials[:, :, 0, 0])
    intersection = jnp.sum(partials[:, :, 1, 0])
    total = jnp.sum(partials[:, :, 2, 0])

    ce_loss = ce_sum / jnp.float32(num_positions)
    union = total - intersection
    iou_loss = 1.0 - (intersection + smooth) / (union + smooth)
    return ce_loss + iou_loss


def _reference_loss(pred, gt, smooth=1.0):
    # Pure-JAX reference mirroring PyTorch semantics, for sanity checking.
    logp = jax.nn.log_softmax(pred, axis=1)
    ce = -jnp.mean(jnp.sum(gt * logp, axis=1))
    s = jax.nn.sigmoid(pred).reshape(-1)
    t = gt.reshape(-1)
    inter = jnp.sum(s * t)
    total = jnp.sum(s + t)
    union = total - inter
    iou_loss = 1.0 - (inter + smooth) / (union + smooth)
    return ce + iou_loss


if __name__ == "__main__":
    key = jax.random.PRNGKey(0)
    k1, k2 = jax.random.split(key)

    N, C, H, W = 2, 4, 16, 16
    pred = jax.random.normal(k1, (N, C, H, W), dtype=jnp.float32)
    # One-hot float ground truth (valid for both CE-with-prob-targets and IoU).
    labels = jax.random.randint(k2, (N, H, W), 0, C)
    ground_truth = jnp.transpose(
        jax.nn.one_hot(labels, C, dtype=jnp.float32), (0, 3, 1, 2)
    )  # [N, C, H, W]

    loss = jax.block_until_ready(segmentation_loss(pred, ground_truth))
    ref = jax.block_until_ready(_reference_loss(pred, ground_truth))
    assert jnp.allclose(loss, ref, rtol=1e-4, atol=1e-4), (loss, ref)

    print("KERNEL_OK")
</pallas_src>

<mosaic_0001>
module attributes {stable_mosaic.version = 11 : i64} {
  func.func @kernel(%arg0: i32, %arg1: i32, %arg2: i32, %arg3: memref<1x4x2x128xf32, #tpu.memory_space<vmem>>, %arg4: memref<1x4x2x128xf32, #tpu.memory_space<vmem>>, %arg5: memref<1x1x3x128xf32, #tpu.memory_space<vmem>>, %arg6: memref<2x128xf32, #tpu.memory_space<vmem>>, %arg7: memref<2x128xf32, #tpu.memory_space<vmem>>, %arg8: memref<2x128xf32, #tpu.memory_space<vmem>>) attributes {dimension_semantics = [#tpu.dimension_semantics<parallel>, #tpu.dimension_semantics<parallel>, #tpu.dimension_semantics<arbitrary>], iteration_bounds = array<i64: 2, 1, 1>, scalar_prefetch = 0 : i64, scratch_operands = 3 : i64, tpu.core_type = #tpu.core_type<tc>, window_params = [{transform_indices = @transform_0, window_bounds = array<i64: 1, 4, 2, 128>}, {transform_indices = @transform_1, window_bounds = array<i64: 1, 4, 2, 128>}, {transform_indices = @transform_2, window_bounds = array<i64: 1, 1, 3, 128>}]} {
    %c0_i32 = arith.constant 0 : i32
    %0 = arith.cmpi eq, %arg2, %c0_i32 : i32
    %1 = arith.extui %0 : i1 to i32
    %c0_i32_0 = arith.constant 0 : i32
    %2 = arith.cmpi ne, %1, %c0_i32_0 : i32
    scf.if %2 {
      %cst_62 = arith.constant 0.000000e+00 : f32
      %101 = vector.broadcast %cst_62 : f32 to vector<2x128xf32>
      %c0_63 = arith.constant 0 : index
      %c0_64 = arith.constant 0 : index
      %102 = vector.load %arg6[%c0_63, %c0_64] : memref<2x128xf32, #tpu.memory_space<vmem>>, vector<2x128xf32>
      tpu.vector_store %arg6[%c0_63, %c0_64], %101 {strides = array<i32>} : memref<2x128xf32, #tpu.memory_space<vmem>>, vector<2x128xf32>,
      %cst_65 = arith.constant 0.000000e+00 : f32
      %103 = vector.broadcast %cst_65 : f32 to vector<2x128xf32>
      %c0_66 = arith.constant 0 : index
      %c0_67 = arith.constant 0 : index
      %104 = vector.load %arg7[%c0_66, %c0_67] : memref<2x128xf32, #tpu.memory_space<vmem>>, vector<2x128xf32>
      tpu.vector_store %arg7[%c0_66, %c0_67], %103 {strides = array<i32>} : memref<2x128xf32, #tpu.memory_space<vmem>>, vector<2x128xf32>,
      %cst_68 = arith.constant 0.000000e+00 : f32
      %105 = vector.broadcast %cst_68 : f32 to vector<2x128xf32>
      %c0_69 = arith.constant 0 : index
      %c0_70 = arith.constant 0 : index
      %106 = vector.load %arg8[%c0_69, %c0_70] : memref<2x128xf32, #tpu.memory_space<vmem>>, vector<2x128xf32>
      tpu.vector_store %arg8[%c0_69, %c0_70], %105 {strides = array<i32>} : memref<2x128xf32, #tpu.memory_space<vmem>>, vector<2x128xf32>,
    } else {
    }
    %c0 = arith.constant 0 : index
    %c0_1 = arith.constant 0 : index
    %c0_2 = arith.constant 0 : index
    %c0_3 = arith.constant 0 : index
    %3 = vector.load %arg3[%c0, %c0_1, %c0_2, %c0_3] : memref<1x4x2x128xf32, #tpu.memory_space<vmem>>, vector<1x1x2x128xf32>
    %4 = vector.shape_cast %3 : vector<1x1x2x128xf32> to vector<2x128xf32>
    %c0_4 = arith.constant 0 : index
    %c1 = arith.constant 1 : index
    %c0_5 = arith.constant 0 : index
    %c0_6 = arith.constant 0 : index
    %5 = vector.load %arg3[%c0_4, %c1, %c0_5, %c0_6] : memref<1x4x2x128xf32, #tpu.memory_space<vmem>>, vector<1x1x2x128xf32>
    %6 = vector.shape_cast %5 : vector<1x1x2x128xf32> to vector<2x128xf32>
    %7 = arith.maximumf %4, %6 : vector<2x128xf32>
    %c0_7 = arith.constant 0 : index
    %c2 = arith.constant 2 : index
    %c0_8 = arith.constant 0 : index
    %c0_9 = arith.constant 0 : index
    %8 = vector.load %arg3[%c0_7, %c2, %c0_8, %c0_9] : memref<1x4x2x128xf32, #tpu.memory_space<vmem>>, vector<1x1x2x128xf32>
    %9 = vector.shape_cast %8 : vector<1x1x2x128xf32> to vector<2x128xf32>
    %10 = arith.maximumf %7, %9 : vector<2x128xf32>
    %c0_10 = arith.constant 0 : index
    %c3 = arith.constant 3 : index
    %c0_11 = arith.constant 0 : index
    %c0_12 = arith.constant 0 : index
    %11 = vector.load %arg3[%c0_10, %c3, %c0_11, %c0_12] : memref<1x4x2x128xf32, #tpu.memory_space<vmem>>, vector<1x1x2x128xf32>
    %12 = vector.shape_cast %11 : vector<1x1x2x128xf32> to vector<2x128xf32>
    %13 = arith.maximumf %10, %12 : vector<2x128xf32>
    %c0_13 = arith.constant 0 : index
    %c0_14 = arith.constant 0 : index
    %c0_15 = arith.constant 0 : index
    %c0_16 = arith.constant 0 : index
    %14 = vector.load %arg3[%c0_13, %c0_14, %c0_15, %c0_16] : memref<1x4x2x128xf32, #tpu.memory_space<vmem>>, vector<1x1x2x128xf32>
    %15 = vector.shape_cast %14 : vector<1x1x2x128xf32> to vector<2x128xf32>
    %c0_17 = arith.constant 0 : index
    %c0_18 = arith.constant 0 : index
    %c0_19 = arith.constant 0 : index
    %c0_20 = arith.constant 0 : index
    %16 = vector.load %arg4[%c0_17, %c0_18, %c0_19, %c0_20] : memref<1x4x2x128xf32, #tpu.memory_space<vmem>>, vector<1x1x2x128xf32>
    %17 = vector.shape_cast %16 : vector<1x1x2x128xf32> to vector<2x128xf32>
    %18 = arith.subf %15, %13 : vector<2x128xf32>
    %19 = math.exp %18 : vector<2x128xf32>
    %20 = arith.negf %15 : vector<2x128xf32>
    %21 = math.exp %20 : vector<2x128xf32>
    %cst = arith.constant 1.000000e+00 : f32
    %22 = vector.broadcast %cst : f32 to vector<2x128xf32>
    %23 = arith.addf %22, %21 : vector<2x128xf32>
    %24 = arith.divf %22, %23 : vector<2x128xf32>
    %25 = arith.mulf %17, %15 : vector<2x128xf32>
    %26 = arith.mulf %24, %17 : vector<2x128xf32>
    %27 = arith.addf %24, %17 : vector<2x128xf32>
    %c0_21 = arith.constant 0 : index
    %c1_22 = arith.constant 1 : index
    %c0_23 = arith.constant 0 : index
    %c0_24 = arith.constant 0 : index
    %28 = vector.load %arg3[%c0_21, %c1_22, %c0_23, %c0_24] : memref<1x4x2x128xf32, #tpu.memory_space<vmem>>, vector<1x1x2x128xf32>
    %29 = vector.shape_cast %28 : vector<1x1x2x128xf32> to vector<2x128xf32>
    %c0_25 = arith.constant 0 : index
    %c1_26 = arith.constant 1 : index
    %c0_27 = arith.constant 0 : index
    %c0_28 = arith.constant 0 : index
    %30 = vector.load %arg4[%c0_25, %c1_26, %c0_27, %c0_28] : memref<1x4x2x128xf32, #tpu.memory_space<vmem>>, vector<1x1x2x128xf32>
    %31 = vector.shape_cast %30 : vector<1x1x2x128xf32> to vector<2x128xf32>
    %32 = arith.subf %29, %13 : vector<2x128xf32>
    %33 = math.exp %32 : vector<2x128xf32>
    %34 = arith.negf %29 : vector<2x128xf32>
    %35 = math.exp %34 : vector<2x128xf32>
    %cst_29 = arith.constant 1.000000e+00 : f32
    %36 = vector.broadcast %cst_29 : f32 to vector<2x128xf32>
    %37 = arith.addf %36, %35 : vector<2x128xf32>
    %38 = arith.divf %36, %37 : vector<2x128xf32>
    %39 = arith.addf %19, %33 : vector<2x128xf32>
    %40 = arith.addf %17, %31 : vector<2x128xf32>
    %41 = arith.mulf %31, %29 : vector<2x128xf32>
    %42 = arith.addf %25, %41 : vector<2x128xf32>
    %43 = arith.mulf %38, %31 : vector<2x128xf32>
    %44 = arith.addf %26, %43 : vector<2x128xf32>
    %45 = arith.addf %27, %38 : vector<2x128xf32>
    %46 = arith.addf %45, %31 : vector<2x128xf32>
    %c0_30 = arith.constant 0 : index
    %c2_31 = arith.constant 2 : index
    %c0_32 = arith.constant 0 : index
    %c0_33 = arith.constant 0 : index
    %47 = vector.load %arg3[%c0_30, %c2_31, %c0_32, %c0_33] : memref<1x4x2x128xf32, #tpu.memory_space<vmem>>, vector<1x1x2x128xf32>
    %48 = vector.shape_cast %47 : vector<1x1x2x128xf32> to vector<2x128xf32>
    %c0_34 = arith.constant 0 : index
    %c2_35 = arith.constant 2 : index
    %c0_36 = arith.constant 0 : index
    %c0_37 = arith.constant 0 : index
    %49 = vector.load %arg4[%c0_34, %c2_35, %c0_36, %c0_37] : memref<1x4x2x128xf32, #tpu.memory_space<vmem>>, vector<1x1x2x128xf32>
    %50 = vector.shape_cast %49 : vector<1x1x2x128xf32> to vector<2x128xf32>
    %51 = arith.subf %48, %13 : vector<2x128xf32>
    %52 = math.exp %51 : vector<2x128xf32>
    %53 = arith.negf %48 : vector<2x128xf32>
    %54 = math.exp %53 : vector<2x128xf32>
    %cst_38 = arith.constant 1.000000e+00 : f32
    %55 = vector.broadcast %cst_38 : f32 to vector<2x128xf32>
    %56 = arith.addf %55, %54 : vector<2x128xf32>
    %57 = arith.divf %55, %56 : vector<2x128xf32>
    %58 = arith.addf %39, %52 : vector<2x128xf32>
    %59 = arith.addf %40, %50 : vector<2x128xf32>
    %60 = arith.mulf %50, %48 : vector<2x128xf32>
    %61 = arith.addf %42, %60 : vector<2x128xf32>
    %62 = arith.mulf %57, %50 : vector<2x128xf32>
    %63 = arith.addf %44, %62 : vector<2x128xf32>
    %64 = arith.addf %46, %57 : vector<2x128xf32>
    %65 = arith.addf %64, %50 : vector<2x128xf32>
    %c0_39 = arith.constant 0 : index
    %c3_40 = arith.constant 3 : index
    %c0_41 = arith.constant 0 : index
    %c0_42 = arith.constant 0 : index
    %66 = vector.load %arg3[%c0_39, %c3_40, %c0_41, %c0_42] : memref<1x4x2x128xf32, #tpu.memory_space<vmem>>, vector<1x1x2x128xf32>
    %67 = vector.shape_cast %66 : vector<1x1x2x128xf32> to vector<2x128xf32>
    %c0_43 = arith.constant 0 : index
    %c3_44 = arith.constant 3 : index
    %c0_45 = arith.constant 0 : index
    %c0_46 = arith.constant 0 : index
    %68 = vector.load %arg4[%c0_43, %c3_44, %c0_45, %c0_46] : memref<1x4x2x128xf32, #tpu.memory_space<vmem>>, vector<1x1x2x128xf32>
    %69 = vector.shape_cast %68 : vector<1x1x2x128xf32> to vector<2x128xf32>
    %70 = arith.subf %67, %13 : vector<2x128xf32>
    %71 = math.exp %70 : vector<2x128xf32>
    %72 = arith.negf %67 : vector<2x128xf32>
    %73 = math.exp %72 : vector<2x128xf32>
    %cst_47 = arith.constant 1.000000e+00 : f32
    %74 = vector.broadcast %cst_47 : f32 to vector<2x128xf32>
    %75 = arith.addf %74, %73 : vector<2x128xf32>
    %76 = arith.divf %74, %75 : vector<2x128xf32>
    %77 = arith.addf %58, %71 : vector<2x128xf32>
    %78 = arith.addf %59, %69 : vector<2x128xf32>
    %79 = arith.mulf %69, %67 : vector<2x128xf32>
    %80 = arith.addf %61, %79 : vector<2x128xf32>
    %81 = arith.mulf %76, %69 : vector<2x128xf32>
    %82 = arith.addf %63, %81 : vector<2x128xf32>
    %83 = arith.addf %65, %76 : vector<2x128xf32>
    %84 = arith.addf %83, %69 : vector<2x128xf32>
    %85 = math.log %77 : vector<2x128xf32>
    %86 = arith.addf %13, %85 : vector<2x128xf32>
    %87 = arith.mulf %78, %86 : vector<2x128xf32>
    %88 = arith.subf %87, %80 : vector<2x128xf32>
    %c0_48 = arith.constant 0 : index
    %c0_49 = arith.constant 0 : index
    %89 = vector.load %arg6[%c0_48, %c0_49] : memref<2x128xf32, #tpu.memory_space<vmem>>, vector<2x128xf32>
    %90 = arith.addf %89, %88 : vector<2x128xf32>
    %c0_50 = arith.constant 0 : index
    %c0_51 = arith.constant 0 : index
    %91 = vector.load %arg6[%c0_50, %c0_51] : memref<2x128xf32, #tpu.memory_space<vmem>>, vector<2x128xf32>
    tpu.vector_store %arg6[%c0_50, %c0_51], %90 {strides = array<i32>} : memref<2x128xf32, #tpu.memory_space<vmem>>, vector<2x128xf32>,
    %c0_52 = arith.constant 0 : index
    %c0_53 = arith.constant 0 : index
    %92 = vector.load %arg7[%c0_52, %c0_53] : memref<2x128xf32, #tpu.memory_space<vmem>>, vector<2x128xf32>
    %93 = arith.addf %92, %82 : vector<2x128xf32>
    %c0_54 = arith.constant 0 : index
    %c0_55 = arith.constant 0 : index
    %94 = vector.load %arg7[%c0_54, %c0_55] : memref<2x128xf32, #tpu.memory_space<vmem>>, vector<2x128xf32>
    tpu.vector_store %arg7[%c0_54, %c0_55], %93 {strides = array<i32>} : memref<2x128xf32, #tpu.memory_space<vmem>>, vector<2x128xf32>,
    %c0_56 = arith.constant 0 : index
    %c0_57 = arith.constant 0 : index
    %95 = vector.load %arg8[%c0_56, %c0_57] : memref<2x128xf32, #tpu.memory_space<vmem>>, vector<2x128xf32>
    %96 = arith.addf %95, %84 : vector<2x128xf32>
    %c0_58 = arith.constant 0 : index
    %c0_59 = arith.constant 0 : index
    %97 = vector.load %arg8[%c0_58, %c0_59] : memref<2x128xf32, #tpu.memory_space<vmem>>, vector<2x128xf32>
    tpu.vector_store %arg8[%c0_58, %c0_59], %96 {strides = array<i32>} : memref<2x128xf32, #tpu.memory_space<vmem>>, vector<2x128xf32>,
    %c0_i32_60 = arith.constant 0 : i32
    %98 = arith.cmpi eq, %arg2, %c0_i32_60 : i32
    %99 = arith.extui %98 : i1 to i32
    %c0_i32_61 = arith.constant 0 : i32
    %100 = arith.cmpi ne, %99, %c0_i32_61 : i32
    scf.if %100 {
      %c0_62 = arith.constant 0 : index
      %c0_63 = arith.constant 0 : index
      %101 = vector.load %arg6[%c0_62, %c0_63] : memref<2x128xf32, #tpu.memory_space<vmem>>, vector<2x128xf32>
      %102 = vector.shape_cast %101 : vector<2x128xf32> to vector<1x2x128xf32>
      %cst_64 = arith.constant dense<0.000000e+00> : vector<1xf32>
      %103 = vector.multi_reduction <add>, %102, %cst_64 [1, 2] : vector<1x2x128xf32> to vector<1xf32>
      %104 = vector.shape_cast %103 : vector<1xf32> to vector<1x1x1xf32>
      %105 = vector.extract %104[0, 0, 0] : f32 from vector<1x1x1xf32>
      %106 = vector.broadcast %105 : f32 to vector<1x128xf32>
      %c0_65 = arith.constant 0 : index
      %c0_66 = arith.constant 0 : index
      %c0_67 = arith.constant 0 : index
      %c0_68 = arith.constant 0 : index
      %107 = vector.load %arg5[%c0_65, %c0_66, %c0_67, %c0_68] : memref<1x1x3x128xf32, #tpu.memory_space<vmem>>, vector<1x1x1x128xf32>
      %108 = vector.shape_cast %107 : vector<1x1x1x128xf32> to vector<1x128xf32>
      %109 = vector.shape_cast %106 : vector<1x128xf32> to vector<1x1x1x128xf32>
      tpu.vector_store %arg5[%c0_65, %c0_66, %c0_67, %c0_68], %109 {strides = array<i32>} : memref<1x1x3x128xf32, #tpu.memory_space<vmem>>, vector<1x1x1x128xf32>,
      %c0_69 = arith.constant 0 : index
      %c0_70 = arith.constant 0 : index
      %110 = vector.load %arg7[%c0_69, %c0_70] : memref<2x128xf32, #tpu.memory_space<vmem>>, vector<2x128xf32>
      %111 = vector.shape_cast %110 : vector<2x128xf32> to vector<1x2x128xf32>
      %cst_71 = arith.constant dense<0.000000e+00> : vector<1xf32>
      %112 = vector.multi_reduction <add>, %111, %cst_71 [1, 2] : vector<1x2x128xf32> to vector<1xf32>
      %113 = vector.shape_cast %112 : vector<1xf32> to vector<1x1x1xf32>
      %114 = vector.extract %113[0, 0, 0] : f32 from vector<1x1x1xf32>
      %115 = vector.broadcast %114 : f32 to vector<1x128xf32>
      %c0_72 = arith.constant 0 : index
      %c0_73 = arith.constant 0 : index
      %c1_74 = arith.constant 1 : index
      %c0_75 = arith.constant 0 : index
      %116 = vector.load %arg5[%c0_72, %c0_73, %c1_74, %c0_75] : memref<1x1x3x128xf32, #tpu.memory_space<vmem>>, vector<1x1x1x128xf32>
      %117 = vector.shape_cast %116 : vector<1x1x1x128xf32> to vector<1x128xf32>
      %118 = vector.shape_cast %115 : vector<1x128xf32> to vector<1x1x1x128xf32>
      tpu.vector_store %arg5[%c0_72, %c0_73, %c1_74, %c0_75], %118 {strides = array<i32>} : memref<1x1x3x128xf32, #tpu.memory_space<vmem>>, vector<1x1x1x128xf32>,
      %c0_76 = arith.constant 0 : index
      %c0_77 = arith.constant 0 : index
      %119 = vector.load %arg8[%c0_76, %c0_77] : memref<2x128xf32, #tpu.memory_space<vmem>>, vector<2x128xf32>
      %120 = vector.shape_cast %119 : vector<2x128xf32> to vector<1x2x128xf32>
      %cst_78 = arith.constant dense<0.000000e+00> : vector<1xf32>
      %121 = vector.multi_reduction <add>, %120, %cst_78 [1, 2] : vector<1x2x128xf32> to vector<1xf32>
      %122 = vector.shape_cast %121 : vector<1xf32> to vector<1x1x1xf32>
      %123 = vector.extract %122[0, 0, 0] : f32 from vector<1x1x1xf32>
      %124 = vector.broadcast %123 : f32 to vector<1x128xf32>
      %c0_79 = arith.constant 0 : index
      %c0_80 = arith.constant 0 : index
      %c2_81 = arith.constant 2 : index
      %c0_82 = arith.constant 0 : index
      %125 = vector.load %arg5[%c0_79, %c0_80, %c2_81, %c0_82] : memref<1x1x3x128xf32, #tpu.memory_space<vmem>>, vector<1x1x1x128xf32>
      %126 = vector.shape_cast %125 : vector<1x1x1x128xf32> to vector<1x128xf32>
      %127 = vector.shape_cast %124 : vector<1x128xf32> to vector<1x1x1x128xf32>
      tpu.vector_store %arg5[%c0_79, %c0_80, %c2_81, %c0_82], %127 {strides = array<i32>} : memref<1x1x3x128xf32, #tpu.memory_space<vmem>>, vector<1x1x1x128xf32>,
    } else {
    }
    return
  }
  func.func @transform_0(%arg0: i32, %arg1: i32, %arg2: i32) -> (i32, i32, i32, i32) {
    %c1_i32 = arith.constant 1 : i32
    %0 = arith.muli %arg1, %c1_i32 : i32
    %1 = arith.addi %0, %arg2 : i32
    %c0_i32 = arith.constant 0 : i32
    %c0_i32_0 = arith.constant 0 : i32
    %c0_i32_1 = arith.constant 0 : i32
    return %arg0, %c0_i32, %1, %c0_i32_0 : i32, i32, i32, i32
  }
  func.func @transform_1(%arg0: i32, %arg1: i32, %arg2: i32) -> (i32, i32, i32, i32) {
    %c1_i32 = arith.constant 1 : i32
    %0 = arith.muli %arg1, %c1_i32 : i32
    %1 = arith.addi %0, %arg2 : i32
    %c0_i32 = arith.constant 0 : i32
    %c0_i32_0 = arith.constant 0 : i32
    %c0_i32_1 = arith.constant 0 : i32
    return %arg0, %c0_i32, %1, %c0_i32_0 : i32, i32, i32, i32
  }
  func.func @transform_2(%arg0: i32, %arg1: i32, %arg2: i32) -> (i32, i32, i32, i32) {
    %c0_i32 = arith.constant 0 : i32
    %c0_i32_0 = arith.constant 0 : i32
    %c0_i32_1 = arith.constant 0 : i32
    return %arg0, %arg1, %c0_i32, %c0_i32_0 : i32, i32, i32, i32
  }
}

</mosaic_0001>

<llo_original>
// kernel: tpu_custom_call.1
$region0: #{tpu_custom_call.1}
  #allocation0 [shape = 'u32[]', space=smem, size = 0x4, offset = 0x4, fixed_abs, tag = 'smem constant byte address 0x4 - core index']
  #allocation1 [shape = 'u32[72,128]{1,0:T(1,128)}', space=vmem, size = 0x9000, scoped, tag = 'internal scratch']
  #allocation2 [shape = 'f32[2,128]{1,0:T(2,128)}', space=vmem, size = 0x400, scoped, tag = 'scratch operand']
  #allocation3 [shape = 'f32[2,128]{1,0:T(2,128)}', space=vmem, size = 0x400, scoped, tag = 'scratch operand']
  #allocation4 [shape = 'f32[2,128]{1,0:T(2,128)}', space=vmem, size = 0x400, scoped, tag = 'scratch operand']
  %s0 = inlined_call_operand.hbm [shape: f32[2,4,2,128], index: 0, kind: input, shape index: {}]
  %s1 = inlined_call_operand.hbm [shape: f32[2,4,2,128], index: 1, kind: input, shape index: {}]
  %s2 = inlined_call_operand.vmem [shape: f32[2,1,3,128], index: 2, kind: output, shape index: {}]
  %s3 = sld [smem:[#allocation0]]
  $region57: #{tpu_custom_call.1} parent=0
    _
  %s5 = ssub.s32 1, %s3
  %s6 = scalar_select 0, %s5, %s3
  $region1: #{tpu_custom_call.1} parent=0
    #allocation5 [shape = 'u8[8192]{0}', space=vmem, size = 0x2000, scoped, tag = 'input window, operand 0']
    #allocation6 [shape = 's32[2]{0}', space=sflag, size = 0x8, scoped, tag = 'scoped memory for tpu_custom_call.1']
    #allocation7 [shape = 'u8[8192]{0}', space=vmem, size = 0x2000, scoped, tag = 'input window, operand 1']
    #allocation8 [shape = 's32[2]{0}', space=sflag, size = 0x8, scoped, tag = 'scoped memory for tpu_custom_call.1']
    %7 = vsyncpa [#allocation6], 0
    %s8 = scalar_lea.sflag [#allocation6], 1
    %9 = vsyncpa %s8, 0
    %10 = vsyncpa [#allocation8], 0
    %s11 = scalar_lea.sflag [#allocation8], 1
    %12 = vsyncpa %s11, 0
    loop: start=0, step=1, limit=4
    $region2: #{tpu_custom_call.1} parent=1 // loop_pre_header
      _
    $region3: #{tpu_custom_call.1} parent=1 // loop_header
      %s14 = sphi 0, %s18
      %p15 = scmp.ge.s32.totalorder %s14, 4
      %s21 = sphi 0, %s40
      %s22 = sphi 0, %s36
      %s23 = sphi 0, %s32
      %s24 = sphi 0, %s21
      %s25 = sphi 0, %s22
      %s26 = sphi 0, %s23
      %s27 = sphi 0, %s24
      %s28 = sphi 0, %s25
      %s29 = sphi 0, %s26
      %s47 = sphi 0, %s49
      %s50 = sphi 0, %s47
      %s51 = sphi 0, %s50
      %s67 = sphi 0, %s51
      %s77 = sphi 0, %s79
      %s80 = sphi 0, %s77
      %s81 = sphi 0, %s80
      %s97 = sphi 0, %s81
      %s105 = sphi 0, %s107
      %s108 = sphi 0, %s105
      %s109 = sphi 0, %s108
      %s125 = sphi 0, %s109
    $region4: #{tpu_custom_call.1} parent=1 // loop_header_branch
      %17 = sbr.rel (%p15) target = $region8
    $region5: #{tpu_custom_call.1} parent=1 // loop_body
      %s19 = ssub.s32 %s14, 1
      %s20 = ssub.s32 %s14, 2
      %s30 = sadd.s32 1, %s23
      %p31 = scmp.ge.s32.totalorder %s30, 1
      %s32 = scalar_select %p31, 0, %s30
      %s33 = sadd.s32 1, %s22
      %s34 = scalar_select %p31, %s33, %s22
      %p35 = scmp.ge.s32.totalorder %s34, 1
      %s36 = scalar_select %p35, 0, %s34
      %s37 = sadd.s32 1, %s21
      %s38 = scalar_select %p35, %s37, %s21
      %p39 = scmp.ge.s32.totalorder %s38, 2
      %s40 = scalar_select %p39, 0, %s38
      %s41 = sadd.s32 %s22, %s23
      %s42 = sadd.s32 %s36, %s32
      %s43 = ssub.s32 %s21, %s40
      %s44 = ssub.s32 %s41, %s42
      %s45 = sor.u32 %s43, %s44
      %p46 = scmp.eq.s32.totalorder %s45, 0
      %s48 = sadd.s32 %s47, 1
      %s49 = scalar_select %p46, %s47, %s48
      %p52 = pneg %p46
      %p53 = scmp.eq.s32.totalorder %s14, 1
      %p54 = por %p52, %p53
      %p55 = scmp.ne.s32.totalorder %s47, %s50
      %p56 = scmp.eq.s32.totalorder %s14, 0
      %p57 = por %p55, %p56
      %p58 = scmp.ne.s32.totalorder %s47, %s50
      %p59 = scmp.eq.s32.totalorder %s19, 1
      %p60 = por %p58, %p59
      %p61 = scmp.ne.s32.totalorder %s50, %s51
      %p62 = scmp.eq.s32.totalorder %s19, 0
      %p63 = por %p61, %p62
      %p64 = scmp.ne.s32.totalorder %s50, %s51
      %p65 = scmp.eq.s32.totalorder %s20, 1
      %p66 = por %p64, %p65
      %p68 = scmp.ne.s32.totalorder %s51, %s67
      %p69 = scmp.eq.s32.totalorder %s20, 0
      %p70 = por %p68, %p69
      %s71 = sadd.s32 %s22, %s23
      %s72 = sadd.s32 %s36, %s32
      %s73 = ssub.s32 %s21, %s40
      %s74 = ssub.s32 %s71, %s72
      %s75 = sor.u32 %s73, %s74
      %p76 = scmp.eq.s32.totalorder %s75, 0
      %s78 = sadd.s32 %s77, 1
      %s79 = scalar_select %p76, %s77, %s78
      %p82 = pneg %p76
      %p83 = scmp.eq.s32.totalorder %s14, 1
      %p84 = por %p82, %p83
      %p85 = scmp.ne.s32.totalorder %s77, %s80
      %p86 = scmp.eq.s32.totalorder %s14, 0
      %p87 = por %p85, %p86
      %p88 = scmp.ne.s32.totalorder %s77, %s80
      %p89 = scmp.eq.s32.totalorder %s19, 1
      %p90 = por %p88, %p89
      %p91 = scmp.ne.s32.totalorder %s80, %s81
      %p92 = scmp.eq.s32.totalorder %s19, 0
      %p93 = por %p91, %p92
      %p94 = scmp.ne.s32.totalorder %s80, %s81
      %p95 = scmp.eq.s32.totalorder %s20, 1
      %p96 = por %p94, %p95
      %p98 = scmp.ne.s32.totalorder %s81, %s97
      %p99 = scmp.eq.s32.totalorder %s20, 0
      %p100 = por %p98, %p99
      %s101 = ssub.s32 %s21, %s40
      %s102 = ssub.s32 %s22, %s36
      %s103 = sor.u32 %s101, %s102
      %p104 = scmp.eq.s32.totalorder %s103, 0
      %s106 = sadd.s32 %s105, 1
      %s107 = scalar_select %p104, %s105, %s106
      %p110 = pneg %p104
      %p111 = scmp.eq.s32.totalorder %s14, 1
      %p112 = por %p110, %p111
      %p113 = scmp.ne.s32.totalorder %s105, %s108
      %p114 = scmp.eq.s32.totalorder %s14, 0
      %p115 = por %p113, %p114
      %p116 = scmp.ne.s32.totalorder %s105, %s108
      %p117 = scmp.eq.s32.totalorder %s19, 1
      %p118 = por %p116, %p117
      %p119 = scmp.ne.s32.totalorder %s108, %s109
      %p120 = scmp.eq.s32.totalorder %s19, 0
      %p121 = por %p119, %p120
      %p122 = scmp.ne.s32.totalorder %s108, %s109
      %p123 = scmp.eq.s32.totalorder %s20, 1
      %p124 = por %p122, %p123
      %p126 = scmp.ne.s32.totalorder %s109, %s125
      %p127 = scmp.eq.s32.totalorder %s20, 0
      %p128 = por %p126, %p127
      %p129 = scmp.le.s32.totalorder 1, %s14
      %p130 = scmp.lt.s32.totalorder %s14, 3
      %p131 = pnand %p129, %p130
      %p132 = pneg %p131
      // Predicated region
      $region9: #{tpu_custom_call.1} parent=5 // pred_check
        _
      $region10: #{tpu_custom_call.1} parent=5 // pred_check_branch
        %134 = sbr.rel (%p131) target = $region12
      $region11: #{tpu_custom_call.1} parent=5 // pred_region
        %s135 = ssub.s32 %s14, 1
      $region12: #{tpu_custom_call.1} parent=5 // pred_fallthru
        _
      %p136 = scmp.lt.s32.totalorder %s14, 2
      // Predicated region
      $region13: #{tpu_custom_call.1} parent=5 // pred_check
        %p137 = pneg %p136
      $region14: #{tpu_custom_call.1} parent=5 // pred_check_branch
        %139 = sbr.rel (%p137) target = $region16
      $region15: #{tpu_custom_call.1} parent=5 // pred_region
        // Predicated region
        $region17: #{tpu_custom_call.1} parent=15 // pred_check
          %p140 = pneg %p57
        $region18: #{tpu_custom_call.1} parent=15 // pred_check_branch
          %142 = sbr.rel (%p140) target = $region20
        $region19: #{tpu_custom_call.1} parent=15 // pred_region
          %s143 = sand.u32 %s47, 1
          %s144 = scalar_lea.sflag [#allocation6], %s143
          %s145 = sand.u32 %s47, 1
          %s146 = smul.addr %s145, 8
          %s147 = scalar_lea.vmem [#allocation5], %s146
          %s148 = sadd.s32 %s22, %s23
          %150 = vsyncadd %s144, 0
          %s151 = smul.addr %s21, 4
          %s152 = sadd.s32 %s148, %s151
          %s153 = smul.addr %s152, 2
          %s154 = scalar_lea.hbm %s0, %s153
          %s155 = sshll.u32 %s154, 4
          %s156 = int_to_ptr.hbm [resolvable:$true] %s155
          %s157 = sshll.u32 %s147, 4
          %s158 = int_to_ptr.vmem [resolvable:$true] %s157
          %163 = dma.hbm_to_vmem [thread:$0]  %s156, 128, %s158, %s144, 32, 32, 2
        $region20: #{tpu_custom_call.1} parent=15 // pred_fallthru
          _
        // Predicated region
        $region21: #{tpu_custom_call.1} parent=15 // pred_check
          %p164 = pneg %p87
        $region22: #{tpu_custom_call.1} parent=15 // pred_check_branch
          %166 = sbr.rel (%p164) target = $region24
        $region23: #{tpu_custom_call.1} parent=15 // pred_region
          %s167 = sand.u32 %s77, 1
          %s168 = scalar_lea.sflag [#allocation8], %s167
          %s169 = sand.u32 %s77, 1
          %s170 = smul.addr %s169, 8
          %s171 = scalar_lea.vmem [#allocation7], %s170
          %s172 = sadd.s32 %s22, %s23
          %174 = vsyncadd %s168, 0
          %s175 = smul.addr %s21, 4
          %s176 = sadd.s32 %s172, %s175
          %s177 = smul.addr %s176, 2
          %s178 = scalar_lea.hbm %s1, %s177
          %s179 = sshll.u32 %s178, 4
          %s180 = int_to_ptr.hbm [resolvable:$true] %s179
          %s181 = sshll.u32 %s171, 4
          %s182 = int_to_ptr.vmem [resolvable:$true] %s181
          %187 = dma.hbm_to_vmem [thread:$0]  %s180, 128, %s182, %s168, 32, 32, 2
        $region24: #{tpu_custom_call.1} parent=15 // pred_fallthru
          _
      $region16: #{tpu_custom_call.1} parent=5 // pred_fallthru
        _
      %p188 = scmp.le.s32.totalorder 1, %s14
      %p189 = scmp.lt.s32.totalorder %s14, 3
      %p190 = pnand %p188, %p189
      %p191 = pneg %p190
      // Predicated region
      $region25: #{tpu_custom_call.1} parent=5 // pred_check
        _
      $region26: #{tpu_custom_call.1} parent=5 // pred_check_branch
        %193 = sbr.rel (%p190) target = $region28
      $region27: #{tpu_custom_call.1} parent=5 // pred_region
        %s194 = ssub.s32 %s14, 1
        %s195 = sand.u32 %s50, 1
        %s196 = scalar_lea.sflag [#allocation6], %s195
        %s197 = sand.u32 %s50, 1
        %s198 = smul.addr %s197, 8
        %s199 = scalar_lea.vmem [#allocation5], %s198
        // Predicated region
        $region29: #{tpu_custom_call.1} parent=27 // pred_check
          %p200 = pneg %p63
        $region30: #{tpu_custom_call.1} parent=27 // pred_check_branch
          %202 = sbr.rel (%p200) target = $region32
        $region31: #{tpu_custom_call.1} parent=27 // pred_region
          %204 = dma.done %s196, 128
        $region32: #{tpu_custom_call.1} parent=27 // pred_fallthru
          _
        %s205 = sand.u32 %s80, 1
        %s206 = scalar_lea.sflag [#allocation8], %s205
        %s207 = sand.u32 %s80, 1
        %s208 = smul.addr %s207, 8
        %s209 = scalar_lea.vmem [#allocation7], %s208
        // Predicated region
        $region33: #{tpu_custom_call.1} parent=27 // pred_check
          %p210 = pneg %p93
        $region34: #{tpu_custom_call.1} parent=27 // pred_check_branch
          %212 = sbr.rel (%p210) target = $region36
        $region35: #{tpu_custom_call.1} parent=27 // pred_region
          %214 = dma.done %s206, 128
        $region36: #{tpu_custom_call.1} parent=27 // pred_fallthru
          _
        %s215 = sand.u32 %s50, 1
        %s216 = scalar_lea.sflag [#allocation6], %s215
        %s217 = sand.u32 %s50, 1
        %s218 = smul.addr %s217, 8
        %s219 = scalar_lea.vmem [#allocation5], %s218
        %p220 = pneg %p63
        %p221 = pneg %p60
        %s222 = sand.u32 %s80, 1
        %s223 = scalar_lea.sflag [#allocation8], %s222
        %s224 = sand.u32 %s80, 1
        %s225 = smul.addr %s224, 8
        %s226 = scalar_lea.vmem [#allocation7], %s225
        %p227 = pneg %p93
        %p228 = pneg %p90
        %p229 = pneg %p121
        %p230 = pneg %p118
        %p231 = scmp.lt.s32.totalorder %s24, 1
        %s232 = scalar_select %p231, %s24, 1
        %p233 = scmp.lt.s32.totalorder %s25, 0
        %s234 = scalar_select %p233, %s25, 0
        %s235 = sadd.s32 %s234, %s232
        %s236 = smul.addr %s235, 4
        %s237 = scalar_lea.vmem %s2, %s236
        %s238 = sadd.s32 %s25, %s26
        %s239 = sadd.s32 %s25, %s26
        %p240 = scmp.lt.s32.totalorder %s24, 1
        %s241 = scalar_select %p240, %s24, 1
        %p242 = scmp.lt.s32.totalorder %s25, 0
        %s243 = scalar_select %p242, %s25, 0
        %s244 = sadd.s32 %s243, %s241
        %s245 = smul.addr %s244, 4
        %s246 = scalar_lea.vmem %s2, %s245
        %p247 = scmp.eq.s32.totalorder %s26, 0
        // Predicated region
        $region37: #{tpu_custom_call.1} parent=27 // pred_check
          %p248 = pneg %p247
        $region38: #{tpu_custom_call.1} parent=27 // pred_check_branch
          %250 = sbr.rel (%p248) target = $region40
        $region39: #{tpu_custom_call.1} parent=27 // pred_region
          %251 = vst [vmem:[#allocation2] sm:$0x3] 0.0
          %252 = vst [vmem:[#allocation3] sm:$0x3] 0.0
          %253 = vst [vmem:[#allocation4] sm:$0x3] 0.0
        $region40: #{tpu_custom_call.1} parent=27 // pred_fallthru
          _
        %v254 = vld [vmem:[%s199] sm:$0x3]
        %s255 = scalar_lea.vmem %s199, 2 [#allocation5]
        %v256 = vld [vmem:[%s255] sm:$0x3]
        %v257 = vmax.f32 %v254, %v256
        %s258 = scalar_lea.vmem %s199, 4 [#allocation5]
        %v259 = vld [vmem:[%s258] sm:$0x3]
        %v260 = vmax.f32 %v257, %v259
        %s261 = scalar_lea.vmem %s199, 6 [#allocation5]
        %v262 = vld [vmem:[%s261] sm:$0x3]
        %v263 = vmax.f32 %v260, %v262
        %v264 = vld [vmem:[%s209] sm:$0x3]
        %v265 = vsub.f32 %v254, %v263
        %v266 = vmul.f32 %v265, 1.442695
        %v267 = vpow.pop %v266
        %v268 = vxor.u32 %v254, 2147483648
        %v269 = vmul.f32 %v268, 1.442695
        %v270 = vpow.pop %v269
        %v271 = vadd.f32 %v270, 1.0
        %v272 = vrcp.pop %v271
        %v273 = vmul.f32 %v271, %v272
        %v274 = vsub.f32 1.0, %v273
        %v275 = vmul.f32 %v272, %v274
        %v276 = vadd.f32 %v272, %v275
        %vm277 = vweird.f32 %v271
        %vm278 = vweird.f32 %v272
        %vm279 = vmor %vm277, %vm278
        %v280 = vsel %vm279, %v272, %v276
        %v281 = vand.u32 2147483647, %v271
        %vm282 = vcmp.eq.f32.partialorder %v281, 8.507059e+37
        %v283 = vand.u32 %v271, 2147483648
        %v284 = vor.u32 1.1754944e-38, %v283
        %v285 = vsel %vm282, %v284, %v280
        %v286 = vmul.f32 1.0, %v285
        %v287 = vmul.f32 %v264, %v254
        %v288 = vmul.f32 %v286, %v264
        %v289 = vadd.f32 %v286, %v264
        %s290 = scalar_lea.vmem %s209, 2 [#allocation7]
        %v291 = vld [vmem:[%s290] sm:$0x3]
        %v292 = vsub.f32 %v256, %v263
        %v293 = vmul.f32 %v292, 1.442695
        %v294 = vpow.pop %v293
        %v295 = vxor.u32 %v256, 2147483648
        %v296 = vmul.f32 %v295, 1.442695
        %v297 = vpow.pop %v296
        %v298 = vadd.f32 %v297, 1.0
        %v299 = vrcp.pop %v298
        %v300 = vmul.f32 %v298, %v299
        %v301 = vsub.f32 1.0, %v300
        %v302 = vmul.f32 %v299, %v301
        %v303 = vadd.f32 %v299, %v302
        %vm304 = vweird.f32 %v298
        %vm305 = vweird.f32 %v299
        %vm306 = vmor %vm304, %vm305
        %v307 = vsel %vm306, %v299, %v303
        %v308 = vand.u32 2147483647, %v298
        %vm309 = vcmp.eq.f32.partialorder %v308, 8.507059e+37
        %v310 = vand.u32 %v298, 2147483648
        %v311 = vor.u32 1.1754944e-38, %v310
        %v312 = vsel %vm309, %v311, %v307
        %v313 = vmul.f32 1.0, %v312
        %v314 = vadd.f32 %v267, %v294
        %v315 = vadd.f32 %v264, %v291
        %v316 = vmul.f32 %v291, %v256
        %v317 = vadd.f32 %v287, %v316
        %v318 = vmul.f32 %v313, %v291
        %v319 = vadd.f32 %v288, %v318
        %v320 = vadd.f32 %v289, %v313
        %v321 = vadd.f32 %v320, %v291
        %s322 = scalar_lea.vmem %s209, 4 [#allocation7]
        %v323 = vld [vmem:[%s322] sm:$0x3]
        %v324 = vsub.f32 %v259, %v263
        %v325 = vmul.f32 %v324, 1.442695
        %v326 = vpow.pop %v325
        %v327 = vxor.u32 %v259, 2147483648
        %v328 = vmul.f32 %v327, 1.442695
        %v329 = vpow.pop %v328
        %v330 = vadd.f32 %v329, 1.0
        %v331 = vrcp.pop %v330
        %v332 = vmul.f32 %v330, %v331
        %v333 = vsub.f32 1.0, %v332
        %v334 = vmul.f32 %v331, %v333
        %v335 = vadd.f32 %v331, %v334
        %vm336 = vweird.f32 %v330
        %vm337 = vweird.f32 %v331
        %vm338 = vmor %vm336, %vm337
        %v339 = vsel %vm338, %v331, %v335
        %v340 = vand.u32 2147483647, %v330
        %vm341 = vcmp.eq.f32.partialorder %v340, 8.507059e+37
        %v342 = vand.u32 %v330, 2147483648
        %v343 = vor.u32 1.1754944e-38, %v342
        %v344 = vsel %vm341, %v343, %v339
        %v345 = vmul.f32 1.0, %v344
        %v346 = vadd.f32 %v314, %v326
        %v347 = vadd.f32 %v315, %v323
        %v348 = vmul.f32 %v323, %v259
        %v349 = vadd.f32 %v317, %v348
        %v350 = vmul.f32 %v345, %v323
        %v351 = vadd.f32 %v319, %v350
        %v352 = vadd.f32 %v321, %v345
        %v353 = vadd.f32 %v352, %v323
        %s354 = scalar_lea.vmem %s209, 6 [#allocation7]
        %v355 = vld [vmem:[%s354] sm:$0x3]
        %v356 = vsub.f32 %v262, %v263
        %v357 = vmul.f32 %v356, 1.442695
        %v358 = vpow.pop %v357
        %v359 = vxor.u32 %v262, 2147483648
        %v360 = vmul.f32 %v359, 1.442695
        %v361 = vpow.pop %v360
        %v362 = vadd.f32 %v361, 1.0
        %v363 = vrcp.pop %v362
        %v364 = vmul.f32 %v362, %v363
        %v365 = vsub.f32 1.0, %v364
        %v366 = vmul.f32 %v363, %v365
        %v367 = vadd.f32 %v363, %v366
        %vm368 = vweird.f32 %v362
        %vm369 = vweird.f32 %v363
        %vm370 = vmor %vm368, %vm369
        %v371 = vsel %vm370, %v363, %v367
        %v372 = vand.u32 2147483647, %v362
        %vm373 = vcmp.eq.f32.partialorder %v372, 8.507059e+37
        %v374 = vand.u32 %v362, 2147483648
        %v375 = vor.u32 1.1754944e-38, %v374
        %v376 = vsel %vm373, %v375, %v371
        %v377 = vmul.f32 1.0, %v376
        %v378 = vadd.f32 %v346, %v358
        %v379 = vadd.f32 %v347, %v355
        %v380 = vmul.f32 %v355, %v262
        %v381 = vadd.f32 %v349, %v380
        %v382 = vmul.f32 %v377, %v355
        %v383 = vadd.f32 %v351, %v382
        %v384 = vadd.f32 %v353, %v377
        %v385 = vadd.f32 %v384, %v355
        %v386 = vlog2.pop %v378
        %v387 = vmul.f32 %v386, 0.6931472
        %v388 = vadd.f32 %v263, %v387
        %v389 = vmul.f32 %v379, %v388
        %v390 = vsub.f32 %v389, %v381
        %v391 = vld [vmem:[#allocation2] sm:$0x3]
        %v392 = vadd.f32 %v391, %v390
        %393 = vst [vmem:[#allocation2] sm:$0x3] %v392
        %v394 = vld [vmem:[#allocation3] sm:$0x3]
        %v395 = vadd.f32 %v394, %v383
        %396 = vst [vmem:[#allocation3] sm:$0x3] %v395
        %v397 = vld [vmem:[#allocation4] sm:$0x3]
        %v398 = vadd.f32 %v397, %v385
        %399 = vst [vmem:[#allocation4] sm:$0x3] %v398
        // Predicated region
        $region41: #{tpu_custom_call.1} parent=27 // pred_check
          %p400 = pneg %p247
        $region42: #{tpu_custom_call.1} parent=27 // pred_check_branch
          %402 = sbr.rel (%p400) target = $region44
        $region43: #{tpu_custom_call.1} parent=27 // pred_region
          %v403 = vld [vmem:[#allocation2] sm:$0x3]
          %vm404 = vcmask 1041408
          %v405 = vsel %vm404, %v403, 0.0
          %406 = vadd.xlane.f32.xlu0 %v405
          %v407 = vpop.xlane.xlu0 %406
          %v408 = vrot.slane %v407, 4
          %v409 = vadd.f32 %v407, %v408
          %v410 = vrot.slane %v409, 2
          %v411 = vadd.f32 %v409, %v410
          %v412 = vrot.slane %v411, 1
          %v413 = vadd.f32 %v411, %v412
          %s414 = vtos %v413
          %v415 = vstv %s414
          %416 = vst [vmem:[%s246] sm:$0x1] %v415
          %v417 = vld [vmem:[#allocation3] sm:$0x3]
          %v418 = vsel %vm404, %v417, 0.0
          %419 = vadd.xlane.f32.xlu0 %v418
          %v420 = vpop.xlane.xlu0 %419
          %v421 = vrot.slane %v420, 4
          %v422 = vadd.f32 %v420, %v421
          %v423 = vrot.slane %v422, 2
          %v424 = vadd.f32 %v422, %v423
          %v425 = vrot.slane %v424, 1
          %v426 = vadd.f32 %v424, %v425
          %s427 = vtos %v426
          %v428 = vstv %s427
          %429 = vst [vmem:[%s246 + $0x1] sm:$0x1] %v428
          %v430 = vld [vmem:[#allocation4] sm:$0x3]
          %v431 = vsel %vm404, %v430, 0.0
          %432 = vadd.xlane.f32.xlu0 %v431
          %v433 = vpop.xlane.xlu0 %432
          %v434 = vrot.slane %v433, 4
          %v435 = vadd.f32 %v433, %v434
          %v436 = vrot.slane %v435, 2
          %v437 = vadd.f32 %v435, %v436
          %v438 = vrot.slane %v437, 1
          %v439 = vadd.f32 %v437, %v438
          %s440 = vtos %v439
          %v441 = vstv %s440
          %442 = vst [vmem:[%s246 + $0x2] sm:$0x1] %v441
        $region44: #{tpu_custom_call.1} parent=27 // pred_fallthru
          _
        %p443 = scmp.lt.s32.totalorder %s24, 1
        %s444 = scalar_select %p443, %s24, 1
        %p445 = scmp.lt.s32.totalorder %s25, 0
        %s446 = scalar_select %p445, %s25, 0
        %s447 = sadd.s32 %s446, %s444
        %s448 = smul.addr %s447, 4
        %s449 = scalar_lea.vmem %s2, %s448
        // Predicated region
        $region45: #{tpu_custom_call.1} parent=27 // pred_check
          %p450 = pneg %p118
        $region46: #{tpu_custom_call.1} parent=27 // pred_check_branch
          %452 = sbr.rel (%p450) target = $region48
        $region47: #{tpu_custom_call.1} parent=27 // pred_region
          _
        $region48: #{tpu_custom_call.1} parent=27 // pred_fallthru
          _
      $region28: #{tpu_custom_call.1} parent=5 // pred_fallthru
        _
      %p453 = scmp.le.s32.totalorder 2, %s14
      // Predicated region
      $region49: #{tpu_custom_call.1} parent=5 // pred_check
        %p454 = pneg %p453
      $region50: #{tpu_custom_call.1} parent=5 // pred_check_branch
        %456 = sbr.rel (%p454) target = $region52
      $region51: #{tpu_custom_call.1} parent=5 // pred_region
        %s457 = ssub.s32 %s14, 2
        // Predicated region
        $region53: #{tpu_custom_call.1} parent=51 // pred_check
          %p458 = pneg %p124
        $region54: #{tpu_custom_call.1} parent=51 // pred_check_branch
          %460 = sbr.rel (%p458) target = $region56
        $region55: #{tpu_custom_call.1} parent=51 // pred_region
          %p461 = scmp.lt.s32.totalorder %s27, 1
          %s462 = scalar_select %p461, %s27, 1
          %p463 = scmp.lt.s32.totalorder %s28, 0
          %s464 = scalar_select %p463, %s28, 0
          %s465 = sadd.s32 %s464, %s462
          %s466 = smul.addr %s465, 4
          %s467 = scalar_lea.vmem %s2, %s466
        $region56: #{tpu_custom_call.1} parent=51 // pred_fallthru
          _
      $region52: #{tpu_custom_call.1} parent=5 // pred_fallthru
        _
    $region6: #{tpu_custom_call.1} parent=1 // loop_footer
      %s18 = sadd.s32 1, %s14
    $region7: #{tpu_custom_call.1} parent=1 // loop_footer_branch
      %13 = sbr.rel target = $region3
    $region8: #{tpu_custom_call.1} parent=1 // loop_exit
      _
    %468 = vsyncpa [#allocation6], 1
    %s469 = scalar_lea.sflag [#allocation6], 1
    %470 = vsyncpa %s469, 1
    %471 = vsyncpa [#allocation8], 1
    %s472 = scalar_lea.sflag [#allocation8], 1
    %473 = vsyncpa %s472, 1

</llo_original>
